<compile_context>
chip_gen: v6e
topology: v6e:2x2x1
jax: 0.10.0
libtpu: 0.0.40
codegen_flags: <defaults>
</compile_context>

<pallas_src>
import math

import jax
import jax.numpy as jnp
from jax.experimental import pallas as pl
from jax.experimental.pallas import tpu as pltpu


def _round_up(x, m):
    return ((x + m - 1) // m) * m


def policy_kernel(x_ref, w1_ref, b1_ref, w2_ref, b2_ref, out_ref):
    # x : [TB, num_inputs]      f32 (cast to bf16 here, hidden under DMA/MXU)
    # w1: [num_inputs, hidden]  bf16, resident     b1: [1, hidden]  f32
    # w2: [hidden, n_pad=128k]  bf16, resident     b2: [1, n_pad]   f32 (-1e30 pad)
    # out:[TB, n_pad]           lane-dense slab
    x = x_ref[...].astype(jnp.bfloat16)

    # Linear1 + ReLU — bf16 MXU matmul, f32 accumulation, f32 elementwise (v5e-safe).
    h = jnp.dot(x, w1_ref[...], preferred_element_type=jnp.float32) + b1_ref[...]
    h = jnp.maximum(h, 0.0)

    # Linear2 — padded action lanes carry a -1e30 bias (kept in f32) so they get
    # exactly-zero probability and never win the row max.
    scores = jnp.dot(h.astype(jnp.bfloat16), w2_ref[...],
                     preferred_element_type=jnp.float32) + b2_ref[...]

    # Numerically-stable softmax over the (padded) action axis, all f32.
    # Exact divide so every row sums to 1 within f32 rounding.
    m = jnp.max(scores, axis=-1, keepdims=True)
    e = jnp.exp(scores - m)
    denom = jnp.sum(e, axis=-1, keepdims=True)
    out_ref[...] = (e / denom).astype(out_ref.dtype)


def prepare_policy_params(w1, b1, w2, b2, lane=128):
    """One-time conversion from PyTorch nn.Linear layout ([out, in] weights) to the
    kernel layout: [in, out] bf16 weights, f32 row biases, actions padded to `lane`."""
    num_actions, hidden = w2.shape

    w1_t = jnp.asarray(w1, jnp.float32).T.astype(jnp.bfloat16)        # [in, hidden]
    b1_r = jnp.asarray(b1, jnp.float32)[None, :]                      # [1, hidden]

    n_pad = _round_up(max(num_actions, lane), lane)
    w2_t = jnp.asarray(w2, jnp.float32).T.astype(jnp.bfloat16)        # [hidden, actions]
    w2_t_pad = jnp.zeros((hidden, n_pad), jnp.bfloat16).at[:, :num_actions].set(w2_t)
    b2_r_pad = jnp.full((1, n_pad), -1e30, jnp.float32)
    b2_r_pad = b2_r_pad.at[0, :num_actions].set(jnp.asarray(b2, jnp.float32))

    return (w1_t, b1_r, w2_t_pad, b2_r_pad), num_actions


def _pick_batch_tile(B, tb_max):
    """Batch tile (multiple of 8).  For mid-size batches split into >=2 grid steps so
    v7x's two TensorCores both get work; big batches use tb_max to amortize the
    ~0.35us/step grid overhead."""
    b8 = _round_up(max(B, 1), 8)
    if b8 <= 8:
        tb = 8
    elif b8 <= tb_max:
        tb = _round_up((b8 + 1) // 2, 8)          # two roughly equal tiles
    else:
        tb = tb_max
    return tb, _round_up(b8, tb)


def policy_forward(x, params, num_actions, *, tb_max=2048, out_dtype=jnp.float32):
    """x: [B, num_inputs] (any float dtype). Returns softmax probs [B, num_actions]."""
    w1_t, b1_r, w2_t_pad, b2_r_pad = params
    B, num_inputs = x.shape
    hidden = w1_t.shape[1]
    n_pad = w2_t_pad.shape[1]

    tb, b_pad = _pick_batch_tile(B, tb_max)

    x_in = jnp.asarray(x, jnp.float32)            # no dtype pass; cast happens in-kernel
    if b_pad != B:
        x_in = jnp.pad(x_in, ((0, b_pad - B), (0, 0)))

    out_bytes = jnp.dtype(out_dtype).itemsize
    cost = pl.CostEstimate(
        flops=2 * b_pad * hidden * (num_inputs + n_pad),
        transcendentals=b_pad * n_pad,
        bytes_accessed=(b_pad * num_inputs * 4 + b_pad * n_pad * out_bytes
                        + num_inputs * hidden * 2 + hidden * n_pad * 2
                        + 4 * (hidden + n_pad)))

    probs_pad = pl.pallas_call(
        policy_kernel,
        out_shape=jax.ShapeDtypeStruct((b_pad, n_pad), out_dtype),
        grid=(b_pad // tb,),
        in_specs=[
            pl.BlockSpec((tb, num_inputs), lambda i: (i, 0)),      # x tile, pipelined
            pl.BlockSpec((num_inputs, hidden), lambda i: (0, 0)),  # w1, resident
            pl.BlockSpec((1, hidden), lambda i: (0, 0)),           # b1, resident
            pl.BlockSpec((hidden, n_pad), lambda i: (0, 0)),       # w2 (padded), resident
            pl.BlockSpec((1, n_pad), lambda i: (0, 0)),            # b2 (padded), resident
        ],
        out_specs=pl.BlockSpec((tb, n_pad), lambda i: (i, 0)),     # lane-dense slab
        compiler_params=pltpu.CompilerParams(
            dimension_semantics=("parallel",)),                    # megacore on v7x
        cost_estimate=cost,
    )(x_in, w1_t, b1_r, w2_t_pad, b2_r_pad)

    # Slice back to the module contract; call under jit so it stays with the consumer.
    return probs_pad[:B, :num_actions]


def init_linear_params(key, out_features, in_features):
    """Deterministic init mimicking torch.nn.Linear default (uniform +/-1/sqrt(fan_in))."""
    kw, kb = jax.random.split(key)
    bound = 1.0 / math.sqrt(in_features)
    w = jax.random.uniform(kw, (out_features, in_features), jnp.float32, -bound, bound)
    b = jax.random.uniform(kb, (out_features,), jnp.float32, -bound, bound)
    return w, b


def _reference_probs(x, w1, b1, w2, b2):
    h = jnp.maximum(x @ w1.T + b1, 0.0)
    s = h @ w2.T + b2
    return jax.nn.softmax(s, axis=-1)


if __name__ == "__main__":
    # Shapes consistent with the module: num_inputs=4 (e.g. CartPole obs),
    # hidden_size=32, action_space.n=4.
    num_inputs, hidden_size, num_actions = 4, 32, 4

    key = jax.random.PRNGKey(0)
    k_x1, k_x2, k_l1, k_l2 = jax.random.split(key, 4)

    w1, b1 = init_linear_params(k_l1, hidden_size, num_inputs)
    w2, b2 = init_linear_params(k_l2, num_actions, hidden_size)
    params, n_act = prepare_policy_params(w1, b1, w2, b2)

    fwd = jax.jit(lambda xi: policy_forward(xi, params, n_act))

    # 1) Small batch (grid of 1, batch padded 2 -> 8).
    x_small = jax.random.normal(k_x1, (2, num_inputs), jnp.float32)
    probs_small = jax.block_until_ready(fwd(x_small))

    # 2) Larger batch exercising the tiled grid (300 -> tb=152, grid=2, both v7x TCs).
    x_large = jax.random.normal(k_x2, (300, num_inputs), jnp.float32)
    probs_large = jax.block_until_ready(fwd(x_large))

    # Sanity checks against a pure-f32 JAX reference (value tolerance covers the
    # bf16 MXU operands; normalization is exact-divide so row sums are tight).
    for x_in, probs in ((x_small, probs_small), (x_large, probs_large)):
        p_ref = _reference_probs(x_in, w1, b1, w2, b2)
        assert probs.shape == (x_in.shape[0], num_actions)
        assert jnp.allclose(probs, p_ref, atol=2e-2, rtol=2e-2)
        assert jnp.allclose(jnp.sum(probs, axis=-1), 1.0, atol=1e-3)
        assert bool(jnp.all(probs >= 0.0))

    print("KERNEL_OK")
</pallas_src>

<mosaic_0001>
module attributes {stable_mosaic.version = 11 : i64} {
  func.func @policy_kernel(%arg0: i32, %arg1: memref<8x4xf32, #tpu.memory_space<vmem>>, %arg2: memref<4x32xbf16, #tpu.memory_space<vmem>>, %arg3: memref<1x32xf32, #tpu.memory_space<vmem>>, %arg4: memref<32x128xbf16, #tpu.memory_space<vmem>>, %arg5: memref<1x128xf32, #tpu.memory_space<vmem>>, %arg6: memref<8x128xf32, #tpu.memory_space<vmem>>) attributes {dimension_semantics = [#tpu.dimension_semantics<parallel>], iteration_bounds = array<i64: 1>, scalar_prefetch = 0 : i64, scratch_operands = 0 : i64, tpu.core_type = #tpu.core_type<tc>, window_params = [{transform_indices = @transform_0, window_bounds = array<i64: 8, 4>}, {pipeline_mode = #tpu.pipeline_mode<synchronous>, transform_indices = @transform_1, window_bounds = array<i64: 4, 32>}, {pipeline_mode = #tpu.pipeline_mode<synchronous>, transform_indices = @transform_2, window_bounds = array<i64: 1, 32>}, {pipeline_mode = #tpu.pipeline_mode<synchronous>, transform_indices = @transform_3, window_bounds = array<i64: 32, 128>}, {pipeline_mode = #tpu.pipeline_mode<synchronous>, transform_indices = @transform_4, window_bounds = array<i64: 1, 128>}, {transform_indices = @transform_5, window_bounds = array<i64: 8, 128>}]} {
    %c0 = arith.constant 0 : index
    %c0_0 = arith.constant 0 : index
    %0 = vector.load %arg1[%c0, %c0_0] : memref<8x4xf32, #tpu.memory_space<vmem>>, vector<8x4xf32>
    %1 = arith.truncf %0 : vector<8x4xf32> to vector<8x4xbf16>
    %c0_1 = arith.constant 0 : index
    %c0_2 = arith.constant 0 : index
    %2 = vector.load %arg2[%c0_1, %c0_2] : memref<4x32xbf16, #tpu.memory_space<vmem>>, vector<4x32xbf16>
    %cst = arith.constant dense<0.000000e+00> : vector<8x32xf32>
    %3 = tpu.matmul %1, %2, %cst {dimension_numbers = #tpu.dot_dimension_numbers<[1], [0], [0], [1], [0, 0, 1, 1], [], []>} : vector<8x4xbf16>, vector<4x32xbf16>, vector<8x32xf32> -> vector<8x32xf32>
    %c0_3 = arith.constant 0 : index
    %c0_4 = arith.constant 0 : index
    %4 = vector.load %arg3[%c0_3, %c0_4] : memref<1x32xf32, #tpu.memory_space<vmem>>, vector<1x32xf32>
    %5 = vector.broadcast %4 : vector<1x32xf32> to vector<8x32xf32>
    %6 = arith.addf %3, %5 : vector<8x32xf32>
    %cst_5 = arith.constant 0.000000e+00 : f32
    %7 = vector.broadcast %cst_5 : f32 to vector<8x32xf32>
    %8 = arith.maximumf %6, %7 : vector<8x32xf32>
    %9 = arith.truncf %8 : vector<8x32xf32> to vector<8x32xbf16>
    %c0_6 = arith.constant 0 : index
    %c0_7 = arith.constant 0 : index
    %10 = vector.load %arg4[%c0_6, %c0_7] : memref<32x128xbf16, #tpu.memory_space<vmem>>, vector<32x128xbf16>
    %cst_8 = arith.constant dense<0.000000e+00> : vector<8x128xf32>
    %11 = tpu.matmul %9, %10, %cst_8 {dimension_numbers = #tpu.dot_dimension_numbers<[1], [0], [0], [1], [0, 0, 1, 1], [], []>} : vector<8x32xbf16>, vector<32x128xbf16>, vector<8x128xf32> -> vector<8x128xf32>
    %c0_9 = arith.constant 0 : index
    %c0_10 = arith.constant 0 : index
    %12 = vector.load %arg5[%c0_9, %c0_10] : memref<1x128xf32, #tpu.memory_space<vmem>>, vector<1x128xf32>
    %13 = vector.broadcast %12 : vector<1x128xf32> to vector<8x128xf32>
    %14 = arith.addf %11, %13 : vector<8x128xf32>
    %cst_11 = arith.constant dense<0xFF800000> : vector<8xf32>
    %15 = vector.multi_reduction <maximumf>, %14, %cst_11 [1] : vector<8x128xf32> to vector<8xf32>
    %16 = vector.shape_cast %15 : vector<8xf32> to vector<8x1xf32>
    %17 = vector.broadcast %16 : vector<8x1xf32> to vector<8x128xf32>
    %18 = arith.subf %14, %17 : vector<8x128xf32>
    %19 = math.exp %18 : vector<8x128xf32>
    %cst_12 = arith.constant dense<0.000000e+00> : vector<8xf32>
    %20 = vector.multi_reduction <add>, %19, %cst_12 [1] : vector<8x128xf32> to vector<8xf32>
    %21 = vector.shape_cast %20 : vector<8xf32> to vector<8x1xf32>
    %22 = vector.broadcast %21 : vector<8x1xf32> to vector<8x128xf32>
    %23 = arith.divf %19, %22 : vector<8x128xf32>
    %c0_13 = arith.constant 0 : index
    %c0_14 = arith.constant 0 : index
    %24 = vector.load %arg6[%c0_13, %c0_14] : memref<8x128xf32, #tpu.memory_space<vmem>>, vector<8x128xf32>
    tpu.vector_store %arg6[%c0_13, %c0_14], %23 {strides = array<i32>} : memref<8x128xf32, #tpu.memory_space<vmem>>, vector<8x128xf32>,
    return
  }
  func.func @transform_0(%arg0: i32) -> (i32, i32) {
    %c0_i32 = arith.constant 0 : i32
    %c0_i32_0 = arith.constant 0 : i32
    return %arg0, %c0_i32 : i32, i32
  }
  func.func @transform_1(%arg0: i32) -> (i32, i32) {
    %c0_i32 = arith.constant 0 : i32
    %c0_i32_0 = arith.constant 0 : i32
    %c0_i32_1 = arith.constant 0 : i32
    return %c0_i32, %c0_i32_0 : i32, i32
  }
  func.func @transform_2(%arg0: i32) -> (i32, i32) {
    %c0_i32 = arith.constant 0 : i32
    %c0_i32_0 = arith.constant 0 : i32
    %c0_i32_1 = arith.constant 0 : i32
    return %c0_i32, %c0_i32_0 : i32, i32
  }
  func.func @transform_3(%arg0: i32) -> (i32, i32) {
    %c0_i32 = arith.constant 0 : i32
    %c0_i32_0 = arith.constant 0 : i32
    %c0_i32_1 = arith.constant 0 : i32
    return %c0_i32, %c0_i32_0 : i32, i32
  }
  func.func @transform_4(%arg0: i32) -> (i32, i32) {
    %c0_i32 = arith.constant 0 : i32
    %c0_i32_0 = arith.constant 0 : i32
    %c0_i32_1 = arith.constant 0 : i32
    return %c0_i32, %c0_i32_0 : i32, i32
  }
  func.func @transform_5(%arg0: i32) -> (i32, i32) {
    %c0_i32 = arith.constant 0 : i32
    %c0_i32_0 = arith.constant 0 : i32
    return %arg0, %c0_i32 : i32, i32
  }
}

</mosaic_0001>

<llo_original>
// kernel: _lambda_.1
$region0: #{_lambda_.1}
  #allocation0 [shape = 'u32[]', space=smem, size = 0x4, offset = 0x4, fixed_abs, tag = 'smem constant byte address 0x4 - core index']
  #allocation1 [shape = 'u32[144,128]{1,0:T(1,128)}', space=vmem, size = 0x12000, scoped, tag = 'internal scratch']
  %s0 = inlined_call_operand.vmem [shape: f32[8,4], index: 0, kind: input, shape index: {}]
  %s1 = inlined_call_operand.hbm [shape: bf16[4,32], index: 1, kind: input, shape index: {}]
  %s2 = inlined_call_operand.hbm [shape: f32[1,32], index: 2, kind: input, shape index: {}]
  %s3 = inlined_call_operand.vmem [shape: bf16[32,128], index: 3, kind: input, shape index: {}]
  %s4 = inlined_call_operand.vmem [shape: f32[1,128], index: 4, kind: input, shape index: {}]
  %s5 = inlined_call_operand.vmem [shape: f32[8,128], index: 5, kind: output, shape index: {}]
  %s6 = sld [smem:[#allocation0]]
  $region38: #{_lambda_.1} parent=0
    _
  %s8 = ssub.s32 1, %s6
  %s9 = scalar_select 0, %s8, %s6
  $region1: #{_lambda_.1} parent=0
    #allocation2 [shape = 'u8[1024]{0}', space=vmem, size = 0x400, scoped, tag = 'input window, operand 1, single buffered']
    #allocation3 [shape = 's32[1]{0}', space=sflag, size = 0x4, scoped, tag = 'scoped memory for _lambda_.1']
    #allocation4 [shape = 'u8[512]{0}', space=vmem, size = 0x400, scoped, tag = 'input window, operand 2, single buffered']
    #allocation5 [shape = 's32[1]{0}', space=sflag, size = 0x4, scoped, tag = 'scoped memory for _lambda_.1']
    %10 = vsyncpa [#allocation3], 0
    %11 = vsyncpa [#allocation5], 0
    // Predicated region
    $region2: #{_lambda_.1} parent=1 // pred_check
      _
    $region3: #{_lambda_.1} parent=1 // pred_check_branch
      %13 = sbr.rel (0) target = $region5
    $region4: #{_lambda_.1} parent=1 // pred_region
      _
    $region5: #{_lambda_.1} parent=1 // pred_fallthru
      _
    // Predicated region
    $region6: #{_lambda_.1} parent=1 // pred_check
      _
    $region7: #{_lambda_.1} parent=1 // pred_check_branch
      %15 = sbr.rel (0) target = $region9
    $region8: #{_lambda_.1} parent=1 // pred_region
      %s17 = ssub.s32 32, 32
      %18 = vsyncadd [#allocation3], %s17
      %s20 = sshll.u32 [#allocation2], 4
      %s21 = int_to_ptr.vmem [resolvable:$true] %s20
      %23 = dma.hbm_to_vmem [thread:$0]  %s1, 32, %s21, [#allocation3]
    $region9: #{_lambda_.1} parent=1 // pred_fallthru
      _
    // Predicated region
    $region10: #{_lambda_.1} parent=1 // pred_check
      _
    $region11: #{_lambda_.1} parent=1 // pred_check_branch
      %25 = sbr.rel (0) target = $region13
    $region12: #{_lambda_.1} parent=1 // pred_region
      %s27 = ssub.s32 16, 16
      %28 = vsyncadd [#allocation5], %s27
      %s30 = sshll.u32 [#allocation4], 4
      %s31 = int_to_ptr.vmem [resolvable:$true] %s30
      %33 = dma.hbm_to_vmem [thread:$0]  %s2, 16, %s31, [#allocation5]
    $region13: #{_lambda_.1} parent=1 // pred_fallthru
      _
    // Predicated region
    $region14: #{_lambda_.1} parent=1 // pred_check
      _
    $region15: #{_lambda_.1} parent=1 // pred_check_branch
      %35 = sbr.rel (0) target = $region17
    $region16: #{_lambda_.1} parent=1 // pred_region
      _
    $region17: #{_lambda_.1} parent=1 // pred_fallthru
      _
    // Predicated region
    $region18: #{_lambda_.1} parent=1 // pred_check
      _
    $region19: #{_lambda_.1} parent=1 // pred_check_branch
      %37 = sbr.rel (0) target = $region21
    $region20: #{_lambda_.1} parent=1 // pred_region
      _
    $region21: #{_lambda_.1} parent=1 // pred_fallthru
      _
    // Predicated region
    $region22: #{_lambda_.1} parent=1 // pred_check
      _
    $region23: #{_lambda_.1} parent=1 // pred_check_branch
      %39 = sbr.rel (0) target = $region25
    $region24: #{_lambda_.1} parent=1 // pred_region
      %40 = dma.done [#allocation3], 32
    $region25: #{_lambda_.1} parent=1 // pred_fallthru
      _
    // Predicated region
    $region26: #{_lambda_.1} parent=1 // pred_check
      _
    $region27: #{_lambda_.1} parent=1 // pred_check_branch
      %42 = sbr.rel (0) target = $region29
    $region28: #{_lambda_.1} parent=1 // pred_region
      %43 = dma.done [#allocation5], 16
    $region29: #{_lambda_.1} parent=1 // pred_fallthru
      _
    %v45 = vld [vmem:[%s0] sm:$0xff]
    %v46 = vpack.c.bf16 %v45, %v45
    %v47 = vld [vmem:[#allocation2] sm:$0x3]
    %v48 = vld [vmem:[#allocation4] sm:$0x1]
    %v50 = vlaneseq
    %v51 = vshrl.u32 %v50, 7
    %v52 = vsub.s32 0, %v51
    %v53 = vrot.slane %v48, %v52
    %vm55 = vcmask 31744
    %v57 = vsel %vm55, %v46, 0
    %vm59 = vcmask 1041408
    %v61 = vsel %vm59, %v47, 0
    %63 = vmatprep.subr.bf16.mxu0 0
    %64 = vmatpush1.bf16.msra.mxu0 0
    %65 = vmatprep.subr.bf16.mxu0 0
    %66 = vmatpush1.bf16.msra.mxu0 0
    %67 = vmatprep.subr.bf16.mxu0 0
    %68 = vmatpush1.bf16.msra.mxu0 0
    %69 = vmatprep.subr.bf16.mxu0 0
    %70 = vmatpush1.bf16.msra.mxu0 0
    %71 = vmatprep.subr.bf16.mxu0 0
    %72 = vmatpush1.bf16.msra.mxu0 0
    %73 = vmatprep.subr.bf16.mxu0 0
    %74 = vmatpush1.bf16.msra.mxu0 0
    %75 = vmatprep.subr.bf16.mxu0 0
    %76 = vmatpush1.bf16.msra.mxu0 0
    %77 = vmatprep.subr.bf16.mxu0 0
    %78 = vmatpush1.bf16.msra.mxu0 %v61
    %79 = vmatprep.subr.bf16.mxu0 0
    %80 = vmatpush2.bf16.msra.mxu0 0
    %81 = vmatprep.subr.bf16.mxu0 0
    %82 = vmatpush2.bf16.msra.mxu0 0
    %83 = vmatprep.subr.bf16.mxu0 0
    %84 = vmatpush2.bf16.msra.mxu0 0
    %85 = vmatprep.subr.bf16.mxu0 0
    %86 = vmatpush2.bf16.msra.mxu0 0
    %87 = vmatprep.subr.bf16.mxu0 0
    %88 = vmatpush2.bf16.msra.mxu0 0
    %89 = vmatprep.subr.bf16.mxu0 0
    %90 = vmatpush2.bf16.msra.mxu0 0
    %91 = vmatprep.subr.bf16.mxu0 0
    %92 = vmatpush2.bf16.msra.mxu0 0
    %93 = vmatprep.subr.bf16.mxu0 0
    %94 = vmatpush2.bf16.msra.mxu0 0
    %95 = vmatprep.mubr.bf16.mxu0 0
    %96 = vmatmul.mubr.bf16.gmra.mxu0 %v57
    %v97 = vpop.f32.mrf.mxu0
    %v98 = vadd.f32 %v53, %v97
    %v99 = vpop.f32.mrf.mxu0
    %v100 = vpop.f32.mrf.mxu0
    %v101 = vpop.f32.mrf.mxu0
    %102 = vdwg.mxu0
    %v103 = vmax.f32 %v98, 0.0
    %v104 = vpack.c.bf16 %v103, %v103
    %v105 = vld [vmem:[%s3] sm:$0xf]
    %v106 = vld [vmem:[%s3 + $0x4] sm:$0xf]
    %v107 = vld [vmem:[%s3 + $0x8] sm:$0xf]
    %v108 = vld [vmem:[%s3 + $0xc] sm:$0xf]
    %v109 = vld [vmem:[%s4] sm:$0x1]
    %v111 = vlaneseq
    %v112 = vshrl.u32 %v111, 7
    %v113 = vsub.s32 0, %v112
    %v114 = vrot.slane %v109, %v113
    %v120 = vunpack.c.l.b16 %v105
    %v121 = vunpack.c.l.b16 %v106
    %v122 = vunpack.c.l.b16 %v107
    %v123 = vunpack.c.l.b16 %v108
    %v124 = vpack.c.b16 %v121, %v120
    %v125 = vpack.c.b16 %v123, %v122
    %vm128 = vcmask 261120
    %v130 = vsel %vm128, %v104, 0
    %132 = vmatprep.subr.bf16.mxu0 0
    %133 = vmatpush1.bf16.msra.mxu0 0
    %134 = vmatprep.subr.bf16.mxu0 0
    %135 = vmatpush1.bf16.msra.mxu0 0
    %136 = vmatprep.subr.bf16.mxu0 0
    %137 = vmatpush1.bf16.msra.mxu0 0
    %138 = vmatprep.subr.bf16.mxu0 0
    %139 = vmatpush1.bf16.msra.mxu0 0
    %140 = vmatprep.subr.bf16.mxu0 0
    %141 = vmatpush1.bf16.msra.mxu0 0
    %142 = vmatprep.subr.bf16.mxu0 0
    %143 = vmatpush1.bf16.msra.mxu0 0
    %144 = vmatprep.subr.bf16.mxu0 0
    %145 = vmatpush1.bf16.msra.mxu0 %v125
    %146 = vmatprep.subr.bf16.mxu0 0
    %147 = vmatpush1.bf16.msra.mxu0 %v124
    %148 = vmatprep.subr.bf16.mxu0 0
    %149 = vmatpush2.bf16.msra.mxu0 0
    %150 = vmatprep.subr.bf16.mxu0 0
    %151 = vmatpush2.bf16.msra.mxu0 0
    %152 = vmatprep.subr.bf16.mxu0 0
    %153 = vmatpush2.bf16.msra.mxu0 0
    %154 = vmatprep.subr.bf16.mxu0 0
    %155 = vmatpush2.bf16.msra.mxu0 0
    %156 = vmatprep.subr.bf16.mxu0 0
    %157 = vmatpush2.bf16.msra.mxu0 0
    %158 = vmatprep.subr.bf16.mxu0 0
    %159 = vmatpush2.bf16.msra.mxu0 0
    %160 = vmatprep.subr.bf16.mxu0 0
    %161 = vmatpush2.bf16.msra.mxu0 0
    %162 = vmatprep.subr.bf16.mxu0 0
    %163 = vmatpush2.bf16.msra.mxu0 0
    %164 = vmatprep.mubr.bf16.mxu0 0
    %165 = vmatmul.mubr.bf16.gmra.mxu0 %v130
    %v166 = vpop.f32.mrf.mxu0
    %v167 = vadd.f32 %v114, %v166
    %v168 = vpop.f32.mrf.mxu0
    %v169 = vpop.f32.mrf.mxu0
    %v170 = vpop.f32.mrf.mxu0
    %171 = vdwg.mxu0
    %172 = vmax.xlane.f32.xlu0 %v167
    %v173 = vpop.xlane.xlu0 %172
    %v174 = vsub.f32 %v167, %v173
    %v175 = vmul.f32 %v174, 1.442695
    %v176 = vpow.pop %v175
    %177 = vadd.xlane.f32.xlu0 %v176
    %v178 = vpop.xlane.xlu0 %177
    %v179 = vrcp.pop %v178
    %v180 = vmul.f32 %v176, %v179
    %181 = vst [vmem:[%s5] sm:$0xff] %v180
    // Predicated region
    $region30: #{_lambda_.1} parent=1 // pred_check
      _
    $region31: #{_lambda_.1} parent=1 // pred_check_branch
      %183 = sbr.rel (0) target = $region33
    $region32: #{_lambda_.1} parent=1 // pred_region
      _
    $region33: #{_lambda_.1} parent=1 // pred_fallthru
      _
    // Predicated region
    $region34: #{_lambda_.1} parent=1 // pred_check
      _
    $region35: #{_lambda_.1} parent=1 // pred_check_branch
      %185 = sbr.rel (0) target = $region37
    $region36: #{_lambda_.1} parent=1 // pred_region
      _
    $region37: #{_lambda_.1} parent=1 // pred_fallthru
      _
    %186 = vsyncpa [#allocation3], 1
    %187 = vsyncpa [#allocation5], 1

</llo_original>
